<compile_context>
chip_gen: v5e
topology: v5e:2x2
jax: 0.10.0
libtpu: 0.0.40
codegen_flags: <defaults>
</compile_context>

<pallas_src>
import functools

import numpy as np
import jax
import jax.numpy as jnp
from jax.experimental import pallas as pl
from jax.experimental.pallas import tpu as pltpu


# ----------------------------------------------------------------------------
# Host-side (data-independent) operator construction (cached per config).
# ----------------------------------------------------------------------------
def _avgpool_matrix(n_in: int, stride: int) -> np.ndarray:
    """nn.AvgPool with kernel_size=1, stride=stride  ==  strided selection."""
    n_out = (n_in - 1) // stride + 1
    m = np.zeros((n_out, n_in), dtype=np.float32)
    m[np.arange(n_out), np.arange(n_out) * stride] = 1.0
    return m


def _upsample_linear_matrix(n_out: int, n_in: int, scale=None) -> np.ndarray:
    """PyTorch trilinear (per-axis linear) interpolation, align_corners=False."""
    if scale is None:          # size= path: scale = in / out
        scale = n_in / n_out
    m = np.zeros((n_out, n_in), dtype=np.float32)
    for o in range(n_out):
        src = (o + 0.5) * scale - 0.5
        if src < 0.0:          # PyTorch clamps negative source coords to 0
            src = 0.0
        i0 = min(int(np.floor(src)), n_in - 1)
        i1 = min(i0 + 1, n_in - 1)
        w1 = src - i0
        m[o, i0] += 1.0 - w1
        m[o, i1] += w1
    return m


def build_stage_matrices(n_layers: int, H: int, W: int):
    """Per-stage (L, R^T) matrices replicating NoConvAE's encoder+decoder."""
    hs, ws = [H], [W]
    for _ in range(n_layers):                       # encoder output sizes
        hs.append((hs[-1] - 1) // 2 + 1)
        ws.append((ws[-1] - 1) // 2 + 1)

    left, right_t = [], []
    for i in range(n_layers):                       # encoder: AvgPool3d(k=1, s=(1,2,2))
        left.append(_avgpool_matrix(hs[i], 2))
        right_t.append(_avgpool_matrix(ws[i], 2).T)

    dh, dw = hs[-1], ws[-1]
    for _ in range(n_layers - 1):                   # decoder: Upsample(scale=(1,2,2))
        left.append(_upsample_linear_matrix(dh * 2, dh, scale=0.5))
        right_t.append(_upsample_linear_matrix(dw * 2, dw, scale=0.5).T)
        dh, dw = dh * 2, dw * 2
    # final layer: Upsample(size=x.shape[-3:])
    left.append(_upsample_linear_matrix(H, dh))
    right_t.append(_upsample_linear_matrix(W, dw).T)
    return left, right_t


@functools.lru_cache(maxsize=None)
def _composed_operators_np(n_layers: int, H: int, W: int):
    """Collapse encoder+decoder into one left (H-axis) and one right (W-axis) matrix."""
    left, right_t = build_stage_matrices(n_layers, H, W)
    l_total = left[0]
    for m in left[1:]:
        l_total = m @ l_total          # later stages applied after earlier ones
    rt_total = right_t[0]
    for m in right_t[1:]:
        rt_total = rt_total @ m        # x @ R1^T @ R2^T @ ...
    return l_total.astype(np.float32), rt_total.astype(np.float32)


_DEVICE_OP_CACHE = {}   # cached device-resident operator tensors


def _fused_operator(n_layers, H, W, hw_pad, hwo_pad, dtype):
    """kron(L^T, R^T) zero-padded to (hw_pad, hwo_pad), cached per config/dtype."""
    key = ("kron", n_layers, H, W, hw_pad, hwo_pad, jnp.dtype(dtype).name)
    m = _DEVICE_OP_CACHE.get(key)
    if m is None:
        l_np, rt_np = _composed_operators_np(n_layers, H, W)
        kron = np.kron(l_np.T, rt_np)                       # (H*W, Ho*Wo)
        pad = np.zeros((hw_pad, hwo_pad), np.float32)
        pad[:kron.shape[0], :kron.shape[1]] = kron
        m = jnp.asarray(pad, dtype=dtype)
        _DEVICE_OP_CACHE[key] = m
    return m


def _separable_operators(n_layers, H, W, dtype):
    """(L^T, R^T) as device arrays, cached per config/dtype."""
    key = ("sep", n_layers, H, W, jnp.dtype(dtype).name)
    ops = _DEVICE_OP_CACHE.get(key)
    if ops is None:
        l_np, rt_np = _composed_operators_np(n_layers, H, W)
        ops = (jnp.asarray(l_np.T, dtype=dtype),            # (H, Ho)
               jnp.asarray(rt_np, dtype=dtype))             # (W, Wo)
        _DEVICE_OP_CACHE[key] = ops
    return ops


# ----------------------------------------------------------------------------
# Hardware-aware budgets & tiling policy.
# ----------------------------------------------------------------------------
def _cdiv(a: int, b: int) -> int:
    return -(-a // b)


def _round_up(x: int, m: int) -> int:
    return _cdiv(int(x), m) * m


def _device_kind() -> str:
    try:
        return jax.devices()[0].device_kind.lower()
    except Exception:
        return ""


@functools.lru_cache(maxsize=None)
def _vmem_limit_bytes() -> int:
    """Scoped-VMEM request derived from the actual per-core VMEM capacity."""
    cap = 0
    try:
        cap = int(getattr(pltpu.get_tpu_info(), "vmem_capacity_bytes", 0))
    except Exception:
        cap = 0
    if cap <= 0:
        cap = 64 << 20          # assume the smallest current part (v7x: 64 MiB / TC)
    # leave ~1/4 for the compiler's own scratch; never ask for more than 96 MiB
    return int(min(cap * 3 // 4, 96 << 20))


def _fuse_operator_cap_bytes(x_dtype) -> int:
    """Max bytes of the kron-fused operator before falling back to the
    separable two-matmul form.  Fusing multiplies FLOPs, so on low-FLOP f32
    parts (v5e-class) a large fused operator flips the kernel HBM-bound ->
    MXU-bound; bf16 operands run at native MXU rate and may fuse larger."""
    kind = _device_kind()
    newer = ("v6" in kind) or ("v7" in kind)
    if jnp.dtype(x_dtype) == jnp.dtype(jnp.bfloat16):
        return (8 << 20) if newer else (4 << 20)
    return (4 << 20) if newer else (1 << 20)


def _choose_tiling(total_rows: int, per_row_bytes: int, row_budget_bytes: int,
                   target_steps: int = 4, min_tile_bytes: int = 1 << 20):
    """Pick (rows_per_block, grid, padded_rows).

    Goals:
      * >= `target_steps` grid steps (>= 2 per TensorCore on v7x) so the
        BlockSpec pipeline overlaps the DMA of step i+1 with compute of step i,
      * each streamed tile >= ~1 MiB (per-step overhead ~0.35us is negligible),
      * footprint (f32 temporaries included in per_row_bytes) within the VMEM
        row budget,
      * tb a multiple of 8 (full sublanes); rows are zero-padded to grid*tb, so
        awkward / prime N*D never degrades to tb=1.
    """
    per_row_bytes = max(int(per_row_bytes), 1)
    tb_cap = max(8, (int(row_budget_bytes) // per_row_bytes) // 8 * 8)
    tb = _round_up(max(1, _cdiv(total_rows, target_steps)), 8)
    tb = max(tb, _round_up(max(1, _cdiv(min_tile_bytes, per_row_bytes)), 8))
    tb = min(tb, tb_cap, _round_up(total_rows, 8))
    tb = max(tb, 8)
    grid = _cdiv(total_rows, tb)
    if grid > 1 and grid % 2 == 1:
        # prefer an even grid (balanced over v7x's two TensorCores) when the
        # rounding does not create a padding-only step
        tb_even = _round_up(_cdiv(total_rows, grid + 1), 8)
        if tb_even >= 8 and _cdiv(total_rows, tb_even) == grid + 1:
            tb, grid = tb_even, grid + 1
    return tb, grid, grid * tb


def _const_spec(shape, single_buffered: bool) -> pl.BlockSpec:
    """BlockSpec for a grid-invariant operand.  With Buffered(1) the operator is
    held single-buffered in VMEM (its index_map never changes), halving its
    footprint; the caller retries without it if unsupported."""
    index_map = lambda i: (0,) * len(shape)
    if single_buffered:
        return pl.BlockSpec(shape, index_map, pipeline_mode=pl.Buffered(1))
    return pl.BlockSpec(shape, index_map)


# ----------------------------------------------------------------------------
# Pallas forward passes.
# ----------------------------------------------------------------------------
def _forward_fused(x, n_layers):
    """One lane-dense (tb, HWp) @ (HWp, HWop) MXU matmul per grid step."""
    N, D, H, W = x.shape
    l_np, rt_np = _composed_operators_np(n_layers, H, W)
    Ho, Wo = l_np.shape[0], rt_np.shape[1]
    HW, HWo = H * W, Ho * Wo
    HWp, HWop = _round_up(HW, 128), _round_up(HWo, 128)     # unmasked vld/vst, aligned MXU K/N
    total = N * D

    op_dtype = jnp.bfloat16 if x.dtype == jnp.bfloat16 else jnp.float32
    needs_cast = x.dtype != jnp.dtype(op_dtype)
    m_t = _fused_operator(n_layers, H, W, HWp, HWop, op_dtype)       # (HWp, HWop)

    isz = x.dtype.itemsize
    op_isz = jnp.dtype(op_dtype).itemsize
    # Footprint per streamed row: double-buffered in/out DMA slabs, the f32
    # matmul accumulator and (only for exotic dtypes) the in-kernel cast copy.
    per_row = (2 * HWp * isz + 2 * HWop * isz + HWop * 4
               + (HWp * 4 if needs_cast else 0))
    const_bytes = HWp * HWop * op_isz
    vmem_limit = _vmem_limit_bytes()
    row_budget = max(vmem_limit - 2 * const_bytes - (4 << 20), 4 << 20)
    tb, grid, padded = _choose_tiling(total, per_row, row_budget)

    x2 = x.reshape(total, HW)
    if padded != total or HWp != HW:
        x2 = jnp.pad(x2, ((0, padded - total), (0, HWp - HW)))

    def kernel(x_ref, m_ref, o_ref):
        xv = x_ref[...]
        if needs_cast:                      # f32 / bf16 inputs go straight to the MXU
            xv = xv.astype(op_dtype)
        o_ref[...] = jnp.dot(xv, m_ref[...],
                             preferred_element_type=jnp.float32).astype(o_ref.dtype)

    def run(single_buffered_const):
        return pl.pallas_call(
            kernel,
            out_shape=jax.ShapeDtypeStruct((padded, HWop), x.dtype),
            grid_spec=pltpu.PrefetchScalarGridSpec(
                num_scalar_prefetch=0,
                grid=(grid,),
                in_specs=[pl.BlockSpec((tb, HWp), lambda i: (i, 0)),
                          _const_spec((HWp, HWop), single_buffered_const)],
                out_specs=pl.BlockSpec((tb, HWop), lambda i: (i, 0)),
            ),
            compiler_params=pltpu.CompilerParams(
                dimension_semantics=("parallel",),
                vmem_limit_bytes=vmem_limit),
        )(x2, m_t)

    try:
        out = run(True)
    except Exception:       # Pallas build without single-buffered pipeline_mode support
        out = run(False)

    return out[:total, :HWo].reshape(N, D, Ho, Wo)


def _forward_separable(x, n_layers):
    """Two-matmul fallback for spatial sizes where kron(L, R) would be too big.

    Each axis is contracted with ONE large MXU matmul (M = tb*W, then tb*Ho);
    the axis swap in between is a cheap last-two-dims (XLU) transpose — no
    per-row tiny matmuls and no (tb, Ho, H) broadcast temporary.  This path is
    meant for large H/W (W, Wo >= 128 keeps it lane-dense); small spatial
    shapes are routed to the fused lane-dense path by the dispatcher.
    """
    N, D, H, W = x.shape
    l_np, rt_np = _composed_operators_np(n_layers, H, W)
    Ho, Wo = l_np.shape[0], rt_np.shape[1]
    total = N * D

    op_dtype = jnp.bfloat16 if x.dtype == jnp.bfloat16 else jnp.float32
    needs_cast = x.dtype != jnp.dtype(op_dtype)
    lt_mat, rt_mat = _separable_operators(n_layers, H, W, op_dtype)   # (H,Ho), (W,Wo)

    isz = x.dtype.itemsize
    op_isz = jnp.dtype(op_dtype).itemsize
    # Conservative per-row footprint: double-buffered in/out DMA slabs plus all
    # in-kernel temporaries (cast copy, both transposes, both f32 matmul results).
    per_row = (2 * H * W * isz + 2 * Ho * Wo * isz
               + (H * W * 4 if needs_cast else 0)
               + H * W * op_isz            # (tb, W, H) transposed copy
               + W * Ho * (4 + op_isz)     # matmul-1 f32 result (+ cast for matmul-2)
               + Ho * W * op_isz           # (tb, Ho, W) transposed copy
               + Ho * Wo * (4 + isz))      # matmul-2 f32 result + store cast
    const_bytes = (H * Ho + W * Wo) * op_isz
    vmem_limit = _vmem_limit_bytes()
    row_budget = max(vmem_limit - 2 * const_bytes - (4 << 20), 4 << 20)
    tb, grid, padded = _choose_tiling(total, per_row, row_budget)

    x2 = x.reshape(total, H, W)
    if padded != total:
        x2 = jnp.pad(x2, ((0, padded - total), (0, 0), (0, 0)))

    def kernel(x_ref, lt_ref, rt_ref, o_ref):
        y = x_ref[...]                                         # (tb, H, W)
        if needs_cast:
            y = y.astype(op_dtype)
        # H axis: ONE (tb*W, H) @ (H, Ho) matmul.
        y = jnp.swapaxes(y, 1, 2).reshape(tb * W, H)
        y = jnp.dot(y, lt_ref[...], preferred_element_type=jnp.float32)
        y = y.reshape(tb, W, Ho).astype(op_dtype)
        # W axis: ONE (tb*Ho, W) @ (W, Wo) matmul.
        y = jnp.swapaxes(y, 1, 2).reshape(tb * Ho, W)
        y = jnp.dot(y, rt_ref[...], preferred_element_type=jnp.float32)
        o_ref[...] = y.reshape(tb, Ho, Wo).astype(o_ref.dtype)

    def run(single_buffered_const):
        return pl.pallas_call(
            kernel,
            out_shape=jax.ShapeDtypeStruct((padded, Ho, Wo), x.dtype),
            grid_spec=pltpu.PrefetchScalarGridSpec(
                num_scalar_prefetch=0,
                grid=(grid,),
                in_specs=[pl.BlockSpec((tb, H, W), lambda i: (i, 0, 0)),
                          _const_spec((H, Ho), single_buffered_const),
                          _const_spec((W, Wo), single_buffered_const)],
                out_specs=pl.BlockSpec((tb, Ho, Wo), lambda i: (i, 0, 0)),
            ),
            compiler_params=pltpu.CompilerParams(
                dimension_semantics=("parallel",),
                vmem_limit_bytes=vmem_limit),
        )(x2, lt_mat, rt_mat)

    try:
        out = run(True)
    except Exception:
        out = run(False)

    return out[:total].reshape(N, D, Ho, Wo)


def noconv_ae_forward(x: jax.Array, n_layers: int, fuse_axes=None) -> jax.Array:
    """Pallas TPU forward of NoConvAE (pooling_dim='spatial', pooling_mode='Avg')."""
    N, D, H, W = x.shape
    l_np, rt_np = _composed_operators_np(n_layers, H, W)
    Ho, Wo = l_np.shape[0], rt_np.shape[1]
    if fuse_axes is None:
        op_isz = 2 if x.dtype == jnp.bfloat16 else 4
        op_bytes = _round_up(H * W, 128) * _round_up(Ho * Wo, 128) * op_isz
        fuse_axes = op_bytes <= _fuse_operator_cap_bytes(x.dtype)
    if fuse_axes:
        return _forward_fused(x, n_layers)
    return _forward_separable(x, n_layers)


# ----------------------------------------------------------------------------
# Plain-JAX reference (per-stage, matches the PyTorch module) for sanity checks.
# ----------------------------------------------------------------------------
def _reference_forward(x, n_layers):
    N, D, H, W = x.shape
    left, right_t = build_stage_matrices(n_layers, H, W)
    y = x.astype(jnp.float32)
    for l, rt in zip(left, right_t):
        y = jnp.einsum("oh,ndhw->ndow", jnp.asarray(l), y)
        y = jnp.einsum("ndhw,wo->ndho", y, jnp.asarray(rt))
    return y.astype(x.dtype)


if __name__ == "__main__":
    key = jax.random.PRNGKey(0)
    # Input implied by forward(): x of shape (N, D, H, W); unsqueeze(1) adds the
    # singleton channel for the 3-D pool / upsample ops.
    x = jax.random.normal(key, (2, 4, 16, 16), dtype=jnp.float32)

    y_ref = _reference_forward(x, n_layers=2)

    # Primary (fused, lane-dense) path, f32.
    y = noconv_ae_forward(x, n_layers=2)
    jax.block_until_ready(y)
    assert y.shape == x.shape, (y.shape, x.shape)
    assert jnp.allclose(y, y_ref, atol=1e-4, rtol=1e-4)

    # Separable fallback path (used when H*W is too large to kron-fuse).
    y_sep = noconv_ae_forward(x, n_layers=2, fuse_axes=False)
    jax.block_until_ready(y_sep)
    assert jnp.allclose(y_sep, y_ref, atol=1e-4, rtol=1e-4)

    # bf16 fast path (bf16 operands fed straight to the MXU, f32 accumulation).
    x_bf16 = x.astype(jnp.bfloat16)
    y_bf16 = noconv_ae_forward(x_bf16, n_layers=2)
    jax.block_until_ready(y_bf16)
    assert y_bf16.dtype == jnp.bfloat16
    assert jnp.allclose(y_bf16.astype(jnp.float32),
                        _reference_forward(x_bf16, 2).astype(jnp.float32),
                        atol=5e-2, rtol=5e-2)

    print("KERNEL_OK")
</pallas_src>

<mosaic_0001>
module attributes {stable_mosaic.version = 11 : i64} {
  func.func @kernel(%arg0: i32, %arg1: memref<8x256xf32, #tpu.memory_space<vmem>>, %arg2: memref<256x256xf32, #tpu.memory_space<vmem>>, %arg3: memref<8x256xf32, #tpu.memory_space<vmem>>) attributes {dimension_semantics = [#tpu.dimension_semantics<parallel>], iteration_bounds = array<i64: 1>, scalar_prefetch = 0 : i64, scratch_operands = 0 : i64, tpu.core_type = #tpu.core_type<tc>, window_params = [{transform_indices = @transform_0, window_bounds = array<i64: 8, 256>}, {pipeline_mode = #tpu.pipeline_mode<synchronous>, transform_indices = @transform_1, window_bounds = array<i64: 256, 256>}, {transform_indices = @transform_2, window_bounds = array<i64: 8, 256>}]} {
    %c0 = arith.constant 0 : index
    %c0_0 = arith.constant 0 : index
    %0 = vector.load %arg1[%c0, %c0_0] : memref<8x256xf32, #tpu.memory_space<vmem>>, vector<8x256xf32>
    %c0_1 = arith.constant 0 : index
    %c0_2 = arith.constant 0 : index
    %1 = vector.load %arg2[%c0_1, %c0_2] : memref<256x256xf32, #tpu.memory_space<vmem>>, vector<256x256xf32>
    %cst = arith.constant dense<0.000000e+00> : vector<8x256xf32>
    %2 = tpu.matmul %0, %1, %cst {dimension_numbers = #tpu.dot_dimension_numbers<[1], [0], [0], [1], [0, 0, 1, 1], [], []>} : vector<8x256xf32>, vector<256x256xf32>, vector<8x256xf32> -> vector<8x256xf32>
    %c0_3 = arith.constant 0 : index
    %c0_4 = arith.constant 0 : index
    %3 = vector.load %arg3[%c0_3, %c0_4] : memref<8x256xf32, #tpu.memory_space<vmem>>, vector<8x256xf32>
    tpu.vector_store %arg3[%c0_3, %c0_4], %2 {strides = array<i32>} : memref<8x256xf32, #tpu.memory_space<vmem>>, vector<8x256xf32>,
    return
  }
  func.func @transform_0(%arg0: i32) -> (i32, i32) {
    %c0_i32 = arith.constant 0 : i32
    %c0_i32_0 = arith.constant 0 : i32
    return %arg0, %c0_i32 : i32, i32
  }
  func.func @transform_1(%arg0: i32) -> (i32, i32) {
    %c0_i32 = arith.constant 0 : i32
    %c0_i32_0 = arith.constant 0 : i32
    %c0_i32_1 = arith.constant 0 : i32
    return %c0_i32, %c0_i32_0 : i32, i32
  }
  func.func @transform_2(%arg0: i32) -> (i32, i32) {
    %c0_i32 = arith.constant 0 : i32
    %c0_i32_0 = arith.constant 0 : i32
    return %arg0, %c0_i32 : i32, i32
  }
}

module attributes {stable_mosaic.version = 11 : i64} {
  func.func @kernel(%arg0: i32, %arg1: memref<8x256xf32, #tpu.memory_space<vmem>>, %arg2: memref<256x256xf32, #tpu.memory_space<vmem>>, %arg3: memref<8x256xf32, #tpu.memory_space<vmem>>) attributes {dimension_semantics = [#tpu.dimension_semantics<parallel>], iteration_bounds = array<i64: 1>, scalar_prefetch = 0 : i64, scratch_operands = 0 : i64, tpu.core_type = #tpu.core_type<tc>, window_params = [{transform_indices = @transform_0, window_bounds = array<i64: 8, 256>}, {pipeline_mode = #tpu.pipeline_mode<synchronous>, transform_indices = @transform_1, window_bounds = array<i64: 256, 256>}, {transform_indices = @transform_2, window_bounds = array<i64: 8, 256>}]} {
    %c0 = arith.constant 0 : index
    %c0_0 = arith.constant 0 : index
    %0 = vector.load %arg1[%c0, %c0_0] : memref<8x256xf32, #tpu.memory_space<vmem>>, vector<8x256xf32>
    %c0_1 = arith.constant 0 : index
    %c0_2 = arith.constant 0 : index
    %1 = vector.load %arg2[%c0_1, %c0_2] : memref<256x256xf32, #tpu.memory_space<vmem>>, vector<256x256xf32>
    %cst = arith.constant dense<0.000000e+00> : vector<8x256xf32>
    %2 = tpu.matmul %0, %1, %cst {dimension_numbers = #tpu.dot_dimension_numbers<[1], [0], [0], [1], [0, 0, 1, 1], [], []>} : vector<8x256xf32>, vector<256x256xf32>, vector<8x256xf32> -> vector<8x256xf32>
    %c0_3 = arith.constant 0 : index
    %c0_4 = arith.constant 0 : index
    %3 = vector.load %arg3[%c0_3, %c0_4] : memref<8x256xf32, #tpu.memory_space<vmem>>, vector<8x256xf32>
    tpu.vector_store %arg3[%c0_3, %c0_4], %2 {strides = array<i32>} : memref<8x256xf32, #tpu.memory_space<vmem>>, vector<8x256xf32>,
    return
  }
  func.func @transform_0(%arg0: i32) -> (i32, i32) {
    %c0_i32 = arith.constant 0 : i32
    %c0_i32_0 = arith.constant 0 : i32
    return %arg0, %c0_i32 : i32, i32
  }
  func.func @transform_1(%arg0: i32) -> (i32, i32) {
    %c0_i32 = arith.constant 0 : i32
    %c0_i32_0 = arith.constant 0 : i32
    %c0_i32_1 = arith.constant 0 : i32
    return %c0_i32, %c0_i32_0 : i32, i32
  }
  func.func @transform_2(%arg0: i32) -> (i32, i32) {
    %c0_i32 = arith.constant 0 : i32
    %c0_i32_0 = arith.constant 0 : i32
    return %arg0, %c0_i32 : i32, i32
  }
}

</mosaic_0001>

<llo_original>
// kernel: tpu_custom_call.1
$region0: #{tpu_custom_call.1}
  #allocation0 [shape = 'u32[]', space=smem, size = 0x4, offset = 0x4, fixed_abs, tag = 'smem constant byte address 0x4 - core index']
  #allocation1 [shape = 'u32[72,128]{1,0:T(1,128)}', space=vmem, size = 0x9000, scoped, tag = 'internal scratch']
  %s0 = inlined_call_operand.hbm [shape: f32[8,256], index: 0, kind: input, shape index: {}]
  %s1 = inlined_call_operand.hbm [shape: f32[256,256], index: 1, kind: input, shape index: {}]
  %s2 = inlined_call_operand.hbm [shape: f32[8,256], index: 2, kind: output, shape index: {}]
  %s3 = sld [smem:[#allocation0]]
  $region26: #{tpu_custom_call.1} parent=0
    _
  %s5 = ssub.s32 1, %s3
  %s6 = scalar_select 0, %s5, %s3
  $region1: #{tpu_custom_call.1} parent=0
    #allocation2 [shape = 'u8[8192]{0}', space=vmem, size = 0x2000, scoped, tag = 'input window, operand 0, single buffered']
    #allocation3 [shape = 's32[1]{0}', space=sflag, size = 0x4, scoped, tag = 'scoped memory for tpu_custom_call.1']
    #allocation4 [shape = 's32[1]{0}', space=sflag, size = 0x4, scoped, tag = 'scoped memory for tpu_custom_call.1']
    #allocation5 [shape = 'u8[262144]{0}', space=vmem, size = 0x40000, scoped, tag = 'input window, operand 1, single buffered']
    #allocation6 [shape = 's32[1]{0}', space=sflag, size = 0x4, scoped, tag = 'scoped memory for tpu_custom_call.1']
    #allocation7 [shape = 'u8[8192]{0}', space=vmem, size = 0x2000, scoped, tag = 'output window, operand 0, single buffered']
    %7 = vsyncpa [#allocation3], 0
    %8 = vsyncpa [#allocation6], 0
    %9 = vsyncpa [#allocation4], 0
    // Predicated region
    $region2: #{tpu_custom_call.1} parent=1 // pred_check
      _
    $region3: #{tpu_custom_call.1} parent=1 // pred_check_branch
      %11 = sbr.rel (0) target = $region5
    $region4: #{tpu_custom_call.1} parent=1 // pred_region
      %13 = vsyncadd [#allocation3], 0
      %s15 = sshll.u32 %s0, 4
      %s16 = int_to_ptr.hbm [resolvable:$true] %s15
      %s17 = sshll.u32 [#allocation2], 4
      %s18 = int_to_ptr.vmem [resolvable:$true] %s17
      %20 = dma.hbm_to_vmem [thread:$0]  %s16, 256, %s18, [#allocation3]
    $region5: #{tpu_custom_call.1} parent=1 // pred_fallthru
      _
    // Predicated region
    $region6: #{tpu_custom_call.1} parent=1 // pred_check
      _
    $region7: #{tpu_custom_call.1} parent=1 // pred_check_branch
      %22 = sbr.rel (0) target = $region9
    $region8: #{tpu_custom_call.1} parent=1 // pred_region
      %24 = vsyncadd [#allocation6], 0
      %s25 = sshll.u32 %s1, 4
      %s26 = int_to_ptr.hbm [resolvable:$true] %s25
      %s27 = sshll.u32 [#allocation5], 4
      %s28 = int_to_ptr.vmem [resolvable:$true] %s27
      %33 = dma.hbm_to_vmem [thread:$0]  %s26, 8192, %s28, [#allocation6], 256, 256, 16
    $region9: #{tpu_custom_call.1} parent=1 // pred_fallthru
      _
    // Predicated region
    $region10: #{tpu_custom_call.1} parent=1 // pred_check
      _
    $region11: #{tpu_custom_call.1} parent=1 // pred_check_branch
      %35 = sbr.rel (0) target = $region13
    $region12: #{tpu_custom_call.1} parent=1 // pred_region
      %37 = dma.done [#allocation3], 256
    $region13: #{tpu_custom_call.1} parent=1 // pred_fallthru
      _
    // Predicated region
    $region14: #{tpu_custom_call.1} parent=1 // pred_check
      _
    $region15: #{tpu_custom_call.1} parent=1 // pred_check_branch
      %39 = sbr.rel (0) target = $region17
    $region16: #{tpu_custom_call.1} parent=1 // pred_region
      %41 = dma.done [#allocation6], 8192
    $region17: #{tpu_custom_call.1} parent=1 // pred_fallthru
      _
    %v42 = vld [vmem:[#allocation2] sm:$0xff]
    %v43 = vld [vmem:[#allocation2 + $0x8] sm:$0xff]
    %v44 = vld [vmem:[#allocation5] sm:$0xff]
    %v45 = vld [vmem:[#allocation5 + $0x8] sm:$0xff]
    %v46 = vld [vmem:[#allocation5 + $0x10] sm:$0xff]
    %v47 = vld [vmem:[#allocation5 + $0x18] sm:$0xff]
    %v48 = vld [vmem:[#allocation5 + $0x20] sm:$0xff]
    %v49 = vld [vmem:[#allocation5 + $0x28] sm:$0xff]
    %v50 = vld [vmem:[#allocation5 + $0x30] sm:$0xff]
    %v51 = vld [vmem:[#allocation5 + $0x38] sm:$0xff]
    %v52 = vld [vmem:[#allocation5 + $0x40] sm:$0xff]
    %v53 = vld [vmem:[#allocation5 + $0x48] sm:$0xff]
    %v54 = vld [vmem:[#allocation5 + $0x50] sm:$0xff]
    %v55 = vld [vmem:[#allocation5 + $0x58] sm:$0xff]
    %v56 = vld [vmem:[#allocation5 + $0x60] sm:$0xff]
    %v57 = vld [vmem:[#allocation5 + $0x68] sm:$0xff]
    %v58 = vld [vmem:[#allocation5 + $0x70] sm:$0xff]
    %v59 = vld [vmem:[#allocation5 + $0x78] sm:$0xff]
    %v60 = vld [vmem:[#allocation5 + $0x80] sm:$0xff]
    %v61 = vld [vmem:[#allocation5 + $0x88] sm:$0xff]
    %v62 = vld [vmem:[#allocation5 + $0x90] sm:$0xff]
    %v63 = vld [vmem:[#allocation5 + $0x98] sm:$0xff]
    %v64 = vld [vmem:[#allocation5 + $0xa0] sm:$0xff]
    %v65 = vld [vmem:[#allocation5 + $0xa8] sm:$0xff]
    %v66 = vld [vmem:[#allocation5 + $0xb0] sm:$0xff]
    %v67 = vld [vmem:[#allocation5 + $0xb8] sm:$0xff]
    %v68 = vld [vmem:[#allocation5 + $0xc0] sm:$0xff]
    %v69 = vld [vmem:[#allocation5 + $0xc8] sm:$0xff]
    %v70 = vld [vmem:[#allocation5 + $0xd0] sm:$0xff]
    %v71 = vld [vmem:[#allocation5 + $0xd8] sm:$0xff]
    %v72 = vld [vmem:[#allocation5 + $0xe0] sm:$0xff]
    %v73 = vld [vmem:[#allocation5 + $0xe8] sm:$0xff]
    %v74 = vld [vmem:[#allocation5 + $0xf0] sm:$0xff]
    %v75 = vld [vmem:[#allocation5 + $0xf8] sm:$0xff]
    %v76 = vld [vmem:[#allocation5 + $0x100] sm:$0xff]
    %v77 = vld [vmem:[#allocation5 + $0x108] sm:$0xff]
    %v78 = vld [vmem:[#allocation5 + $0x110] sm:$0xff]
    %v79 = vld [vmem:[#allocation5 + $0x118] sm:$0xff]
    %v80 = vld [vmem:[#allocation5 + $0x120] sm:$0xff]
    %v81 = vld [vmem:[#allocation5 + $0x128] sm:$0xff]
    %v82 = vld [vmem:[#allocation5 + $0x130] sm:$0xff]
    %v83 = vld [vmem:[#allocation5 + $0x138] sm:$0xff]
    %v84 = vld [vmem:[#allocation5 + $0x140] sm:$0xff]
    %v85 = vld [vmem:[#allocation5 + $0x148] sm:$0xff]
    %v86 = vld [vmem:[#allocation5 + $0x150] sm:$0xff]
    %v87 = vld [vmem:[#allocation5 + $0x158] sm:$0xff]
    %v88 = vld [vmem:[#allocation5 + $0x160] sm:$0xff]
    %v89 = vld [vmem:[#allocation5 + $0x168] sm:$0xff]
    %v90 = vld [vmem:[#allocation5 + $0x170] sm:$0xff]
    %v91 = vld [vmem:[#allocation5 + $0x178] sm:$0xff]
    %v92 = vld [vmem:[#allocation5 + $0x180] sm:$0xff]
    %v93 = vld [vmem:[#allocation5 + $0x188] sm:$0xff]
    %v94 = vld [vmem:[#allocation5 + $0x190] sm:$0xff]
    %v95 = vld [vmem:[#allocation5 + $0x198] sm:$0xff]
    %v96 = vld [vmem:[#allocation5 + $0x1a0] sm:$0xff]
    %v97 = vld [vmem:[#allocation5 + $0x1a8] sm:$0xff]
    %v98 = vld [vmem:[#allocation5 + $0x1b0] sm:$0xff]
    %v99 = vld [vmem:[#allocation5 + $0x1b8] sm:$0xff]
    %v100 = vld [vmem:[#allocation5 + $0x1c0] sm:$0xff]
    %v101 = vld [vmem:[#allocation5 + $0x1c8] sm:$0xff]
    %v102 = vld [vmem:[#allocation5 + $0x1d0] sm:$0xff]
    %v103 = vld [vmem:[#allocation5 + $0x1d8] sm:$0xff]
    %v104 = vld [vmem:[#allocation5 + $0x1e0] sm:$0xff]
    %v105 = vld [vmem:[#allocation5 + $0x1e8] sm:$0xff]
    %v106 = vld [vmem:[#allocation5 + $0x1f0] sm:$0xff]
    %v107 = vld [vmem:[#allocation5 + $0x1f8] sm:$0xff]
    %108 = vmatpush.msra.mxu0 %v74
    %109 = vmatpush.msra.mxu0 %v72
    %110 = vmatpush.msra.mxu0 %v70
    %111 = vmatpush.msra.mxu0 %v68
    %112 = vmatpush.msra.mxu0 %v66
    %113 = vmatpush.msra.mxu0 %v64
    %114 = vmatpush.msra.mxu0 %v62
    %115 = vmatpush.msra.mxu0 %v60
    %116 = vmatpush.msra.mxu0 %v58
    %117 = vmatpush.msra.mxu0 %v56
    %118 = vmatpush.msra.mxu0 %v54
    %119 = vmatpush.msra.mxu0 %v52
    %120 = vmatpush.msra.mxu0 %v50
    %121 = vmatpush.msra.mxu0 %v48
    %122 = vmatpush.msra.mxu0 %v46
    %123 = vmatpush.msra.mxu0 %v44
    %124 = vmatmul.f32.gmra.mxu0 %v42
    %v125 = vpop.f32.mrf.mxu0
    %v126 = vadd.f32 0.0, %v125
    %127 = vdwg.mxu0
    %128 = vmatpush.msra.mxu0 %v106
    %129 = vmatpush.msra.mxu0 %v104
    %130 = vmatpush.msra.mxu0 %v102
    %131 = vmatpush.msra.mxu0 %v100
    %132 = vmatpush.msra.mxu0 %v98
    %133 = vmatpush.msra.mxu0 %v96
    %134 = vmatpush.msra.mxu0 %v94
    %135 = vmatpush.msra.mxu0 %v92
    %136 = vmatpush.msra.mxu0 %v90
    %137 = vmatpush.msra.mxu0 %v88
    %138 = vmatpush.msra.mxu0 %v86
    %139 = vmatpush.msra.mxu0 %v84
    %140 = vmatpush.msra.mxu0 %v82
    %141 = vmatpush.msra.mxu0 %v80
    %142 = vmatpush.msra.mxu0 %v78
    %143 = vmatpush.msra.mxu0 %v76
    %144 = vmatmul.f32.gmra.mxu0 %v43
    %v145 = vpop.f32.mrf.mxu0
    %v146 = vadd.f32 %v126, %v145
    %147 = vdwg.mxu0
    %148 = vmatpush.msra.mxu0 %v75
    %149 = vmatpush.msra.mxu0 %v73
    %150 = vmatpush.msra.mxu0 %v71
    %151 = vmatpush.msra.mxu0 %v69
    %152 = vmatpush.msra.mxu0 %v67
    %153 = vmatpush.msra.mxu0 %v65
    %154 = vmatpush.msra.mxu0 %v63
    %155 = vmatpush.msra.mxu0 %v61
    %156 = vmatpush.msra.mxu0 %v59
    %157 = vmatpush.msra.mxu0 %v57
    %158 = vmatpush.msra.mxu0 %v55
    %159 = vmatpush.msra.mxu0 %v53
    %160 = vmatpush.msra.mxu0 %v51
    %161 = vmatpush.msra.mxu0 %v49
    %162 = vmatpush.msra.mxu0 %v47
    %163 = vmatpush.msra.mxu0 %v45
    %164 = vmatmul.f32.gmra.mxu0 %v42
    %v165 = vpop.f32.mrf.mxu0
    %v166 = vadd.f32 0.0, %v165
    %167 = vdwg.mxu0
    %168 = vmatpush.msra.mxu0 %v107
    %169 = vmatpush.msra.mxu0 %v105
    %170 = vmatpush.msra.mxu0 %v103
    %171 = vmatpush.msra.mxu0 %v101
    %172 = vmatpush.msra.mxu0 %v99
    %173 = vmatpush.msra.mxu0 %v97
    %174 = vmatpush.msra.mxu0 %v95
    %175 = vmatpush.msra.mxu0 %v93
    %176 = vmatpush.msra.mxu0 %v91
    %177 = vmatpush.msra.mxu0 %v89
    %178 = vmatpush.msra.mxu0 %v87
    %179 = vmatpush.msra.mxu0 %v85
    %180 = vmatpush.msra.mxu0 %v83
    %181 = vmatpush.msra.mxu0 %v81
    %182 = vmatpush.msra.mxu0 %v79
    %183 = vmatpush.msra.mxu0 %v77
    %184 = vmatmul.f32.gmra.mxu0 %v43
    %v185 = vpop.f32.mrf.mxu0
    %v186 = vadd.f32 %v166, %v185
    %187 = vdwg.mxu0
    %188 = vst [vmem:[#allocation7] sm:$0xff] %v146
    %189 = vst [vmem:[#allocation7 + $0x8] sm:$0xff] %v186
    // Predicated region
    $region18: #{tpu_custom_call.1} parent=1 // pred_check
      _
    $region19: #{tpu_custom_call.1} parent=1 // pred_check_branch
      %191 = sbr.rel (0) target = $region21
    $region20: #{tpu_custom_call.1} parent=1 // pred_region
      %193 = vsyncadd [#allocation4], 0
      %s195 = sshll.u32 [#allocation7], 4
      %s196 = int_to_ptr.vmem [resolvable:$true] %s195
      %s197 = sshll.u32 %s2, 4
      %s198 = int_to_ptr.hbm [resolvable:$true] %s197
      %200 = dma.vmem_to_hbm [thread:$0]  %s196, 256, %s198, [#allocation4]
    $region21: #{tpu_custom_call.1} parent=1 // pred_fallthru
      _
    // Predicated region
    $region22: #{tpu_custom_call.1} parent=1 // pred_check
      _
    $region23: #{tpu_custom_call.1} parent=1 // pred_check_branch
      %202 = sbr.rel (0) target = $region25
    $region24: #{tpu_custom_call.1} parent=1 // pred_region
      %204 = dma.done [#allocation4], 256
    $region25: #{tpu_custom_call.1} parent=1 // pred_fallthru
      _
    %205 = vsyncpa [#allocation3], 1
    %206 = vsyncpa [#allocation6], 1
    %207 = vsyncpa [#allocation4], 1

// kernel: tpu_custom_call.1
$region0: #{tpu_custom_call.1}
  #allocation0 [shape = 'u32[]', space=smem, size = 0x4, offset = 0x4, fixed_abs, tag = 'smem constant byte address 0x4 - core index']
  #allocation1 [shape = 'u32[72,128]{1,0:T(1,128)}', space=vmem, size = 0x9000, scoped, tag = 'internal scratch']
  %s0 = inlined_call_operand.hbm [shape: f32[8,256], index: 0, kind: input, shape index: {}]
  %s1 = inlined_call_operand.hbm [shape: f32[256,256], index: 1, kind: input, shape index: {}]
  %s2 = inlined_call_operand.hbm [shape: f32[8,256], index: 2, kind: output, shape index: {}]
  %s3 = sld [smem:[#allocation0]]
  $region26: #{tpu_custom_call.1} parent=0
    _
  %s5 = ssub.s32 1, %s3
  %s6 = scalar_select 0, %s5, %s3
  $region1: #{tpu_custom_call.1} parent=0
    #allocation2 [shape = 'u8[8192]{0}', space=vmem, size = 0x2000, scoped, tag = 'input window, operand 0, single buffered']
    #allocation3 [shape = 's32[1]{0}', space=sflag, size = 0x4, scoped, tag = 'scoped memory for tpu_custom_call.1']
    #allocation4 [shape = 's32[1]{0}', space=sflag, size = 0x4, scoped, tag = 'scoped memory for tpu_custom_call.1']
    #allocation5 [shape = 'u8[262144]{0}', space=vmem, size = 0x40000, scoped, tag = 'input window, operand 1, single buffered']
    #allocation6 [shape = 's32[1]{0}', space=sflag, size = 0x4, scoped, tag = 'scoped memory for tpu_custom_call.1']
    #allocation7 [shape = 'u8[8192]{0}', space=vmem, size = 0x2000, scoped, tag = 'output window, operand 0, single buffered']
    %7 = vsyncpa [#allocation3], 0
    %8 = vsyncpa [#allocation6], 0
    %9 = vsyncpa [#allocation4], 0
    // Predicated region
    $region2: #{tpu_custom_call.1} parent=1 // pred_check
      _
    $region3: #{tpu_custom_call.1} parent=1 // pred_check_branch
      %11 = sbr.rel (0) target = $region5
    $region4: #{tpu_custom_call.1} parent=1 // pred_region
      %13 = vsyncadd [#allocation3], 0
      %s15 = sshll.u32 %s0, 4
      %s16 = int_to_ptr.hbm [resolvable:$true] %s15
      %s17 = sshll.u32 [#allocation2], 4
      %s18 = int_to_ptr.vmem [resolvable:$true] %s17
      %20 = dma.hbm_to_vmem [thread:$0]  %s16, 256, %s18, [#allocation3]
    $region5: #{tpu_custom_call.1} parent=1 // pred_fallthru
      _
    // Predicated region
    $region6: #{tpu_custom_call.1} parent=1 // pred_check
      _
    $region7: #{tpu_custom_call.1} parent=1 // pred_check_branch
      %22 = sbr.rel (0) target = $region9
    $region8: #{tpu_custom_call.1} parent=1 // pred_region
      %24 = vsyncadd [#allocation6], 0
      %s25 = sshll.u32 %s1, 4
      %s26 = int_to_ptr.hbm [resolvable:$true] %s25
      %s27 = sshll.u32 [#allocation5], 4
      %s28 = int_to_ptr.vmem [resolvable:$true] %s27
      %33 = dma.hbm_to_vmem [thread:$0]  %s26, 8192, %s28, [#allocation6], 256, 256, 16
    $region9: #{tpu_custom_call.1} parent=1 // pred_fallthru
      _
    // Predicated region
    $region10: #{tpu_custom_call.1} parent=1 // pred_check
      _
    $region11: #{tpu_custom_call.1} parent=1 // pred_check_branch
      %35 = sbr.rel (0) target = $region13
    $region12: #{tpu_custom_call.1} parent=1 // pred_region
      %37 = dma.done [#allocation3], 256
    $region13: #{tpu_custom_call.1} parent=1 // pred_fallthru
      _
    // Predicated region
    $region14: #{tpu_custom_call.1} parent=1 // pred_check
      _
    $region15: #{tpu_custom_call.1} parent=1 // pred_check_branch
      %39 = sbr.rel (0) target = $region17
    $region16: #{tpu_custom_call.1} parent=1 // pred_region
      %41 = dma.done [#allocation6], 8192
    $region17: #{tpu_custom_call.1} parent=1 // pred_fallthru
      _
    %v42 = vld [vmem:[#allocation2] sm:$0xff]
    %v43 = vld [vmem:[#allocation2 + $0x8] sm:$0xff]
    %v44 = vld [vmem:[#allocation5] sm:$0xff]
    %v45 = vld [vmem:[#allocation5 + $0x8] sm:$0xff]
    %v46 = vld [vmem:[#allocation5 + $0x10] sm:$0xff]
    %v47 = vld [vmem:[#allocation5 + $0x18] sm:$0xff]
    %v48 = vld [vmem:[#allocation5 + $0x20] sm:$0xff]
    %v49 = vld [vmem:[#allocation5 + $0x28] sm:$0xff]
    %v50 = vld [vmem:[#allocation5 + $0x30] sm:$0xff]
    %v51 = vld [vmem:[#allocation5 + $0x38] sm:$0xff]
    %v52 = vld [vmem:[#allocation5 + $0x40] sm:$0xff]
    %v53 = vld [vmem:[#allocation5 + $0x48] sm:$0xff]
    %v54 = vld [vmem:[#allocation5 + $0x50] sm:$0xff]
    %v55 = vld [vmem:[#allocation5 + $0x58] sm:$0xff]
    %v56 = vld [vmem:[#allocation5 + $0x60] sm:$0xff]
    %v57 = vld [vmem:[#allocation5 + $0x68] sm:$0xff]
    %v58 = vld [vmem:[#allocation5 + $0x70] sm:$0xff]
    %v59 = vld [vmem:[#allocation5 + $0x78] sm:$0xff]
    %v60 = vld [vmem:[#allocation5 + $0x80] sm:$0xff]
    %v61 = vld [vmem:[#allocation5 + $0x88] sm:$0xff]
    %v62 = vld [vmem:[#allocation5 + $0x90] sm:$0xff]
    %v63 = vld [vmem:[#allocation5 + $0x98] sm:$0xff]
    %v64 = vld [vmem:[#allocation5 + $0xa0] sm:$0xff]
    %v65 = vld [vmem:[#allocation5 + $0xa8] sm:$0xff]
    %v66 = vld [vmem:[#allocation5 + $0xb0] sm:$0xff]
    %v67 = vld [vmem:[#allocation5 + $0xb8] sm:$0xff]
    %v68 = vld [vmem:[#allocation5 + $0xc0] sm:$0xff]
    %v69 = vld [vmem:[#allocation5 + $0xc8] sm:$0xff]
    %v70 = vld [vmem:[#allocation5 + $0xd0] sm:$0xff]
    %v71 = vld [vmem:[#allocation5 + $0xd8] sm:$0xff]
    %v72 = vld [vmem:[#allocation5 + $0xe0] sm:$0xff]
    %v73 = vld [vmem:[#allocation5 + $0xe8] sm:$0xff]
    %v74 = vld [vmem:[#allocation5 + $0xf0] sm:$0xff]
    %v75 = vld [vmem:[#allocation5 + $0xf8] sm:$0xff]
    %v76 = vld [vmem:[#allocation5 + $0x100] sm:$0xff]
    %v77 = vld [vmem:[#allocation5 + $0x108] sm:$0xff]
    %v78 = vld [vmem:[#allocation5 + $0x110] sm:$0xff]
    %v79 = vld [vmem:[#allocation5 + $0x118] sm:$0xff]
    %v80 = vld [vmem:[#allocation5 + $0x120] sm:$0xff]
    %v81 = vld [vmem:[#allocation5 + $0x128] sm:$0xff]
    %v82 = vld [vmem:[#allocation5 + $0x130] sm:$0xff]
    %v83 = vld [vmem:[#allocation5 + $0x138] sm:$0xff]
    %v84 = vld [vmem:[#allocation5 + $0x140] sm:$0xff]
    %v85 = vld [vmem:[#allocation5 + $0x148] sm:$0xff]
    %v86 = vld [vmem:[#allocation5 + $0x150] sm:$0xff]
    %v87 = vld [vmem:[#allocation5 + $0x158] sm:$0xff]
    %v88 = vld [vmem:[#allocation5 + $0x160] sm:$0xff]
    %v89 = vld [vmem:[#allocation5 + $0x168] sm:$0xff]
    %v90 = vld [vmem:[#allocation5 + $0x170] sm:$0xff]
    %v91 = vld [vmem:[#allocation5 + $0x178] sm:$0xff]
    %v92 = vld [vmem:[#allocation5 + $0x180] sm:$0xff]
    %v93 = vld [vmem:[#allocation5 + $0x188] sm:$0xff]
    %v94 = vld [vmem:[#allocation5 + $0x190] sm:$0xff]
    %v95 = vld [vmem:[#allocation5 + $0x198] sm:$0xff]
    %v96 = vld [vmem:[#allocation5 + $0x1a0] sm:$0xff]
    %v97 = vld [vmem:[#allocation5 + $0x1a8] sm:$0xff]
    %v98 = vld [vmem:[#allocation5 + $0x1b0] sm:$0xff]
    %v99 = vld [vmem:[#allocation5 + $0x1b8] sm:$0xff]
    %v100 = vld [vmem:[#allocation5 + $0x1c0] sm:$0xff]
    %v101 = vld [vmem:[#allocation5 + $0x1c8] sm:$0xff]
    %v102 = vld [vmem:[#allocation5 + $0x1d0] sm:$0xff]
    %v103 = vld [vmem:[#allocation5 + $0x1d8] sm:$0xff]
    %v104 = vld [vmem:[#allocation5 + $0x1e0] sm:$0xff]
    %v105 = vld [vmem:[#allocation5 + $0x1e8] sm:$0xff]
    %v106 = vld [vmem:[#allocation5 + $0x1f0] sm:$0xff]
    %v107 = vld [vmem:[#allocation5 + $0x1f8] sm:$0xff]
    %108 = vmatpush.msra.mxu0 %v74
    %109 = vmatpush.msra.mxu0 %v72
    %110 = vmatpush.msra.mxu0 %v70
    %111 = vmatpush.msra.mxu0 %v68
    %112 = vmatpush.msra.mxu0 %v66
    %113 = vmatpush.msra.mxu0 %v64
    %114 = vmatpush.msra.mxu0 %v62
    %115 = vmatpush.msra.mxu0 %v60
    %116 = vmatpush.msra.mxu0 %v58
    %117 = vmatpush.msra.mxu0 %v56
    %118 = vmatpush.msra.mxu0 %v54
    %119 = vmatpush.msra.mxu0 %v52
    %120 = vmatpush.msra.mxu0 %v50
    %121 = vmatpush.msra.mxu0 %v48
    %122 = vmatpush.msra.mxu0 %v46
    %123 = vmatpush.msra.mxu0 %v44
    %124 = vmatmul.f32.gmra.mxu0 %v42
    %v125 = vpop.f32.mrf.mxu0
    %v126 = vadd.f32 0.0, %v125
    %127 = vdwg.mxu0
    %128 = vmatpush.msra.mxu0 %v106
    %129 = vmatpush.msra.mxu0 %v104
    %130 = vmatpush.msra.mxu0 %v102
    %131 = vmatpush.msra.mxu0 %v100
    %132 = vmatpush.msra.mxu0 %v98
    %133 = vmatpush.msra.mxu0 %v96
    %134 = vmatpush.msra.mxu0 %v94
    %135 = vmatpush.msra.mxu0 %v92
    %136 = vmatpush.msra.mxu0 %v90
    %137 = vmatpush.msra.mxu0 %v88
    %138 = vmatpush.msra.mxu0 %v86
    %139 = vmatpush.msra.mxu0 %v84
    %140 = vmatpush.msra.mxu0 %v82
    %141 = vmatpush.msra.mxu0 %v80
    %142 = vmatpush.msra.mxu0 %v78
    %143 = vmatpush.msra.mxu0 %v76
    %144 = vmatmul.f32.gmra.mxu0 %v43
    %v145 = vpop.f32.mrf.mxu0
    %v146 = vadd.f32 %v126, %v145
    %147 = vdwg.mxu0
    %148 = vmatpush.msra.mxu0 %v75
    %149 = vmatpush.msra.mxu0 %v73
    %150 = vmatpush.msra.mxu0 %v71
    %151 = vmatpush.msra.mxu0 %v69
    %152 = vmatpush.msra.mxu0 %v67
    %153 = vmatpush.msra.mxu0 %v65
    %154 = vmatpush.msra.mxu0 %v63
    %155 = vmatpush.msra.mxu0 %v61
    %156 = vmatpush.msra.mxu0 %v59
    %157 = vmatpush.msra.mxu0 %v57
    %158 = vmatpush.msra.mxu0 %v55
    %159 = vmatpush.msra.mxu0 %v53
    %160 = vmatpush.msra.mxu0 %v51
    %161 = vmatpush.msra.mxu0 %v49
    %162 = vmatpush.msra.mxu0 %v47
    %163 = vmatpush.msra.mxu0 %v45
    %164 = vmatmul.f32.gmra.mxu0 %v42
    %v165 = vpop.f32.mrf.mxu0
    %v166 = vadd.f32 0.0, %v165
    %167 = vdwg.mxu0
    %168 = vmatpush.msra.mxu0 %v107
    %169 = vmatpush.msra.mxu0 %v105
    %170 = vmatpush.msra.mxu0 %v103
    %171 = vmatpush.msra.mxu0 %v101
    %172 = vmatpush.msra.mxu0 %v99
    %173 = vmatpush.msra.mxu0 %v97
    %174 = vmatpush.msra.mxu0 %v95
    %175 = vmatpush.msra.mxu0 %v93
    %176 = vmatpush.msra.mxu0 %v91
    %177 = vmatpush.msra.mxu0 %v89
    %178 = vmatpush.msra.mxu0 %v87
    %179 = vmatpush.msra.mxu0 %v85
    %180 = vmatpush.msra.mxu0 %v83
    %181 = vmatpush.msra.mxu0 %v81
    %182 = vmatpush.msra.mxu0 %v79
    %183 = vmatpush.msra.mxu0 %v77
    %184 = vmatmul.f32.gmra.mxu0 %v43
    %v185 = vpop.f32.mrf.mxu0
    %v186 = vadd.f32 %v166, %v185
    %187 = vdwg.mxu0
    %188 = vst [vmem:[#allocation7] sm:$0xff] %v146
    %189 = vst [vmem:[#allocation7 + $0x8] sm:$0xff] %v186
    // Predicated region
    $region18: #{tpu_custom_call.1} parent=1 // pred_check
      _
    $region19: #{tpu_custom_call.1} parent=1 // pred_check_branch
      %191 = sbr.rel (0) target = $region21
    $region20: #{tpu_custom_call.1} parent=1 // pred_region
      %193 = vsyncadd [#allocation4], 0
      %s195 = sshll.u32 [#allocation7], 4
      %s196 = int_to_ptr.vmem [resolvable:$true] %s195
      %s197 = sshll.u32 %s2, 4
      %s198 = int_to_ptr.hbm [resolvable:$true] %s197
      %200 = dma.vmem_to_hbm [thread:$0]  %s196, 256, %s198, [#allocation4]
    $region21: #{tpu_custom_call.1} parent=1 // pred_fallthru
      _
    // Predicated region
    $region22: #{tpu_custom_call.1} parent=1 // pred_check
      _
    $region23: #{tpu_custom_call.1} parent=1 // pred_check_branch
      %202 = sbr.rel (0) target = $region25
    $region24: #{tpu_custom_call.1} parent=1 // pred_region
      %204 = dma.done [#allocation4], 256
    $region25: #{tpu_custom_call.1} parent=1 // pred_fallthru
      _
    %205 = vsyncpa [#allocation3], 1
    %206 = vsyncpa [#allocation6], 1
    %207 = vsyncpa [#allocation4], 1

</llo_original>
